<compile_context>
chip_gen: v6e
topology: v6e:2x2x1
jax: 0.10.0
libtpu: 0.0.40
codegen_flags: <defaults>
</compile_context>

<pallas_src>
from functools import partial

import jax
import jax.numpy as jnp
from jax.experimental import pallas as pl
from jax.experimental.pallas import tpu as pltpu


def _round_up(n, m):
    return ((n + m - 1) // m) * m


def _multihead_gcn_kernel(h_ref, x_ref, a_ref, wh_ref, wx_ref, b_ref, out_ref,
                          *, ho):
    # Stage 1: per-stream feature transform for ALL heads at once
    # (lane dim = H * n_out, so the MXU output width is fully used).
    hw = jnp.dot(h_ref[...], wh_ref[...], preferred_element_type=jnp.float32)
    xw = jnp.dot(x_ref[...], wx_ref[...], preferred_element_type=jnp.float32)

    # Stage 2: ONE fused GCN aggregation for both streams:
    #   A_norm @ [h*Wh | x*Wx] -> (row_block, 2*H*n_out), then + [bh | bx].
    cat = jnp.concatenate([hw, xw], axis=-1)
    agg = jnp.dot(a_ref[...], cat, preferred_element_type=jnp.float32) + b_ref[...]

    hg = agg[:, :ho]
    xg = agg[:, ho:]

    # gate(h, x): GRU-style convex gate  z = sigmoid(h); out = z*x + (1-z)*h
    # TODO(synk): gate_module is injected in the PyTorch code; its exact form
    # is external to this module, so a standard sigmoid convex gate is used.
    z = jax.nn.sigmoid(hg)
    out_ref[...] = (z * xg + (1.0 - z) * hg).astype(out_ref.dtype)


def multihead_module(h, x, a_norm, wh, bh, wx, bx,
                     compute_dtype=jnp.float32, row_block_max=512):
    """h: [N, n_hidden], x: [N, n_input], a_norm: [N, N] dense GCN-normalized adj,
       wh: [H, n_hidden, n_out], bh: [H, n_out],
       wx: [H, n_input,  n_out], bx: [H, n_out]  ->  [N, n_out]

    compute_dtype=jnp.bfloat16 halves HBM/VMEM traffic for the O(N^2) adjacency
    and hits the v6e/v7x bf16 MXU path (accumulation stays f32); default is f32
    so the self-check matches the f32 reference bit-closely.
    """
    n_heads, n_hidden, n_output = wh.shape
    n_input = wx.shape[1]
    N = h.shape[0]
    ho = n_heads * n_output                       # flattened head*output lane dim

    # --- flatten heads into the lane axis of the weights -------------------
    wh_flat = jnp.transpose(wh, (1, 0, 2)).reshape(n_hidden, ho)
    wx_flat = jnp.transpose(wx, (1, 0, 2)).reshape(n_input, ho)
    b_cat = jnp.concatenate([bh.reshape(1, ho), bx.reshape(1, ho)], axis=1)

    # --- pad to MXU / vreg friendly shapes (zero padding is exact) ---------
    n_pad = _round_up(max(N, 8), 128)
    if n_pad > row_block_max:
        # Row-tile A for large graphs (keeps the (row_block, N) tile inside the
        # 32 MiB scoped-VMEM default, important on v7x's 64 MiB VMEM) and lets
        # the "parallel" row axis split across v7x's two TensorCores.
        n_pad = _round_up(n_pad, row_block_max)
        row_block = row_block_max
    else:
        row_block = n_pad
    fh_pad = _round_up(n_hidden, 128)
    fx_pad = _round_up(n_input, 128)

    def pad2(arr, rows, cols):
        return jnp.pad(arr, ((0, rows - arr.shape[0]), (0, cols - arr.shape[1])))

    h_p = pad2(h, n_pad, fh_pad).astype(compute_dtype)
    x_p = pad2(x, n_pad, fx_pad).astype(compute_dtype)
    a_p = pad2(a_norm, n_pad, n_pad).astype(compute_dtype)
    wh_p = pad2(wh_flat, fh_pad, ho).astype(compute_dtype)
    wx_p = pad2(wx_flat, fx_pad, ho).astype(compute_dtype)
    b_cat = b_cat.astype(jnp.float32)             # bias add / gate stay in f32

    kernel = partial(_multihead_gcn_kernel, ho=ho)

    slab = pl.pallas_call(
        kernel,
        out_shape=jax.ShapeDtypeStruct((n_pad, ho), jnp.float32),
        grid_spec=pltpu.PrefetchScalarGridSpec(
            num_scalar_prefetch=0,
            grid=(n_pad // row_block,),
            in_specs=[
                pl.BlockSpec((n_pad, fh_pad), lambda i: (0, 0)),
                pl.BlockSpec((n_pad, fx_pad), lambda i: (0, 0)),
                pl.BlockSpec((row_block, n_pad), lambda i: (i, 0)),
                pl.BlockSpec((fh_pad, ho), lambda i: (0, 0)),
                pl.BlockSpec((fx_pad, ho), lambda i: (0, 0)),
                pl.BlockSpec((1, 2 * ho), lambda i: (0, 0)),
            ],
            out_specs=pl.BlockSpec((row_block, ho), lambda i: (i, 0)),
        ),
        compiler_params=pltpu.CompilerParams(
            dimension_semantics=("parallel",)),
    )(h_p, x_p, a_p, wh_p, wx_p, b_cat)

    # torch.stack(dim=1) followed by mean(dim=1) == reshape + mean over heads
    # on the lane-dense slab (cheap XLA epilogue, keeps kernel stores unmasked).
    return slab[:N].reshape(N, n_heads, n_output).mean(axis=1)


def build_norm_adj(edge_index, num_nodes):
    """Dense GCN-normalized adjacency (PyG gcn_norm with self-loops):
       A[dst, src] = deg^-1/2[src] * deg^-1/2[dst],   out = A @ (X W)."""
    src = edge_index[0]
    dst = edge_index[1]
    loop = jnp.arange(num_nodes, dtype=src.dtype)
    src = jnp.concatenate([src, loop])
    dst = jnp.concatenate([dst, loop])
    deg = jnp.zeros((num_nodes,), jnp.float32).at[dst].add(1.0)
    dinv = jax.lax.rsqrt(jnp.maximum(deg, 1e-12))
    w = dinv[src] * dinv[dst]
    a = jnp.zeros((num_nodes, num_nodes), jnp.float32).at[dst, src].add(w)
    return a


def reference_forward(h, x, a_norm, wh, bh, wx, bx):
    """Pure-JAX reference for correctness checking (per-head loop, f32)."""
    outs = []
    for i in range(wh.shape[0]):
        hg = a_norm @ (h @ wh[i]) + bh[i]
        xg = a_norm @ (x @ wx[i]) + bx[i]
        z = jax.nn.sigmoid(hg)
        outs.append(z * xg + (1.0 - z) * hg)
    return jnp.mean(jnp.stack(outs, axis=1), axis=1)


if __name__ == "__main__":
    key = jax.random.PRNGKey(0)
    N, n_input, n_hidden, n_output, n_heads, E = 16, 8, 16, 32, 8, 48

    ks = jax.random.split(key, 8)
    h = jax.random.normal(ks[0], (N, n_hidden), jnp.float32)
    x = jax.random.normal(ks[1], (N, n_input), jnp.float32)
    edge_index = jax.random.randint(ks[2], (2, E), 0, N, dtype=jnp.int32)

    # Deterministic (glorot-ish) parameter init for each head's GCNConv.
    wh = jax.random.normal(ks[3], (n_heads, n_hidden, n_output), jnp.float32) \
        * (1.0 / jnp.sqrt(n_hidden))
    wx = jax.random.normal(ks[4], (n_heads, n_input, n_output), jnp.float32) \
        * (1.0 / jnp.sqrt(n_input))
    bh = jax.random.normal(ks[5], (n_heads, n_output), jnp.float32) * 0.01
    bx = jax.random.normal(ks[6], (n_heads, n_output), jnp.float32) * 0.01

    a_norm = build_norm_adj(edge_index, N)

    out = multihead_module(h, x, a_norm, wh, bh, wx, bx)
    out = jax.block_until_ready(out)

    ref = reference_forward(h, x, a_norm, wh, bh, wx, bx)
    assert out.shape == (N, n_output)
    assert jnp.allclose(out, ref, atol=1e-5, rtol=1e-5)

    print("KERNEL_OK")
</pallas_src>

<mosaic_0001>
module attributes {stable_mosaic.version = 11 : i64} {
  func.func @_multihead_gcn_kernel(%arg0: i32, %arg1: memref<128x128xf32, #tpu.memory_space<vmem>>, %arg2: memref<128x128xf32, #tpu.memory_space<vmem>>, %arg3: memref<128x128xf32, #tpu.memory_space<vmem>>, %arg4: memref<128x256xf32, #tpu.memory_space<vmem>>, %arg5: memref<128x256xf32, #tpu.memory_space<vmem>>, %arg6: memref<1x512xf32, #tpu.memory_space<vmem>>, %arg7: memref<128x256xf32, #tpu.memory_space<vmem>>) attributes {dimension_semantics = [#tpu.dimension_semantics<parallel>], iteration_bounds = array<i64: 1>, scalar_prefetch = 0 : i64, scratch_operands = 0 : i64, tpu.core_type = #tpu.core_type<tc>, window_params = [{pipeline_mode = #tpu.pipeline_mode<synchronous>, transform_indices = @transform_0, window_bounds = array<i64: 128, 128>}, {pipeline_mode = #tpu.pipeline_mode<synchronous>, transform_indices = @transform_1, window_bounds = array<i64: 128, 128>}, {transform_indices = @transform_2, window_bounds = array<i64: 128, 128>}, {pipeline_mode = #tpu.pipeline_mode<synchronous>, transform_indices = @transform_3, window_bounds = array<i64: 128, 256>}, {pipeline_mode = #tpu.pipeline_mode<synchronous>, transform_indices = @transform_4, window_bounds = array<i64: 128, 256>}, {pipeline_mode = #tpu.pipeline_mode<synchronous>, transform_indices = @transform_5, window_bounds = array<i64: 1, 512>}, {transform_indices = @transform_6, window_bounds = array<i64: 128, 256>}]} {
    %c0 = arith.constant 0 : index
    %c0_0 = arith.constant 0 : index
    %0 = vector.load %arg1[%c0, %c0_0] : memref<128x128xf32, #tpu.memory_space<vmem>>, vector<128x128xf32>
    %c0_1 = arith.constant 0 : index
    %c0_2 = arith.constant 0 : index
    %1 = vector.load %arg4[%c0_1, %c0_2] : memref<128x256xf32, #tpu.memory_space<vmem>>, vector<128x256xf32>
    %cst = arith.constant dense<0.000000e+00> : vector<128x256xf32>
    %2 = tpu.matmul %0, %1, %cst {dimension_numbers = #tpu.dot_dimension_numbers<[1], [0], [0], [1], [0, 0, 1, 1], [], []>} : vector<128x128xf32>, vector<128x256xf32>, vector<128x256xf32> -> vector<128x256xf32>
    %c0_3 = arith.constant 0 : index
    %c0_4 = arith.constant 0 : index
    %3 = vector.load %arg2[%c0_3, %c0_4] : memref<128x128xf32, #tpu.memory_space<vmem>>, vector<128x128xf32>
    %c0_5 = arith.constant 0 : index
    %c0_6 = arith.constant 0 : index
    %4 = vector.load %arg5[%c0_5, %c0_6] : memref<128x256xf32, #tpu.memory_space<vmem>>, vector<128x256xf32>
    %cst_7 = arith.constant dense<0.000000e+00> : vector<128x256xf32>
    %5 = tpu.matmul %3, %4, %cst_7 {dimension_numbers = #tpu.dot_dimension_numbers<[1], [0], [0], [1], [0, 0, 1, 1], [], []>} : vector<128x128xf32>, vector<128x256xf32>, vector<128x256xf32> -> vector<128x256xf32>
    %6 = tpu.concatenate %2, %5 in 1 : vector<128x256xf32>, vector<128x256xf32> -> vector<128x512xf32>
    %c0_8 = arith.constant 0 : index
    %c0_9 = arith.constant 0 : index
    %7 = vector.load %arg3[%c0_8, %c0_9] : memref<128x128xf32, #tpu.memory_space<vmem>>, vector<128x128xf32>
    %cst_10 = arith.constant dense<0.000000e+00> : vector<128x512xf32>
    %8 = tpu.matmul %7, %6, %cst_10 {dimension_numbers = #tpu.dot_dimension_numbers<[1], [0], [0], [1], [0, 0, 1, 1], [], []>} : vector<128x128xf32>, vector<128x512xf32>, vector<128x512xf32> -> vector<128x512xf32>
    %c0_11 = arith.constant 0 : index
    %c0_12 = arith.constant 0 : index
    %9 = vector.load %arg6[%c0_11, %c0_12] : memref<1x512xf32, #tpu.memory_space<vmem>>, vector<1x512xf32>
    %10 = vector.broadcast %9 : vector<1x512xf32> to vector<128x512xf32>
    %11 = arith.addf %8, %10 : vector<128x512xf32>
    %12 = vector.extract_strided_slice %11 {offsets = [0, 0], sizes = [128, 256], strides = [1, 1]} : vector<128x512xf32> to vector<128x256xf32>
    %13 = vector.extract_strided_slice %11 {offsets = [0, 256], sizes = [128, 256], strides = [1, 1]} : vector<128x512xf32> to vector<128x256xf32>
    %14 = arith.negf %12 : vector<128x256xf32>
    %15 = math.exp %14 : vector<128x256xf32>
    %cst_13 = arith.constant 1.000000e+00 : f32
    %16 = vector.broadcast %cst_13 : f32 to vector<128x256xf32>
    %17 = arith.addf %16, %15 : vector<128x256xf32>
    %18 = arith.divf %16, %17 : vector<128x256xf32>
    %19 = arith.mulf %18, %13 : vector<128x256xf32>
    %cst_14 = arith.constant 1.000000e+00 : f32
    %20 = vector.broadcast %cst_14 : f32 to vector<128x256xf32>
    %21 = arith.subf %20, %18 : vector<128x256xf32>
    %22 = arith.mulf %21, %12 : vector<128x256xf32>
    %23 = arith.addf %19, %22 : vector<128x256xf32>
    %c0_15 = arith.constant 0 : index
    %c0_16 = arith.constant 0 : index
    %24 = vector.load %arg7[%c0_15, %c0_16] : memref<128x256xf32, #tpu.memory_space<vmem>>, vector<128x256xf32>
    tpu.vector_store %arg7[%c0_15, %c0_16], %23 {strides = array<i32>} : memref<128x256xf32, #tpu.memory_space<vmem>>, vector<128x256xf32>,
    return
  }
  func.func @transform_0(%arg0: i32) -> (i32, i32) {
    %c0_i32 = arith.constant 0 : i32
    %c0_i32_0 = arith.constant 0 : i32
    %c0_i32_1 = arith.constant 0 : i32
    return %c0_i32, %c0_i32_0 : i32, i32
  }
  func.func @transform_1(%arg0: i32) -> (i32, i32) {
    %c0_i32 = arith.constant 0 : i32
    %c0_i32_0 = arith.constant 0 : i32
    %c0_i32_1 = arith.constant 0 : i32
    return %c0_i32, %c0_i32_0 : i32, i32
  }
  func.func @transform_2(%arg0: i32) -> (i32, i32) {
    %c0_i32 = arith.constant 0 : i32
    %c0_i32_0 = arith.constant 0 : i32
    return %arg0, %c0_i32 : i32, i32
  }
  func.func @transform_3(%arg0: i32) -> (i32, i32) {
    %c0_i32 = arith.constant 0 : i32
    %c0_i32_0 = arith.constant 0 : i32
    %c0_i32_1 = arith.constant 0 : i32
    return %c0_i32, %c0_i32_0 : i32, i32
  }
  func.func @transform_4(%arg0: i32) -> (i32, i32) {
    %c0_i32 = arith.constant 0 : i32
    %c0_i32_0 = arith.constant 0 : i32
    %c0_i32_1 = arith.constant 0 : i32
    return %c0_i32, %c0_i32_0 : i32, i32
  }
  func.func @transform_5(%arg0: i32) -> (i32, i32) {
    %c0_i32 = arith.constant 0 : i32
    %c0_i32_0 = arith.constant 0 : i32
    %c0_i32_1 = arith.constant 0 : i32
    return %c0_i32, %c0_i32_0 : i32, i32
  }
  func.func @transform_6(%arg0: i32) -> (i32, i32) {
    %c0_i32 = arith.constant 0 : i32
    %c0_i32_0 = arith.constant 0 : i32
    return %arg0, %c0_i32 : i32, i32
  }
}

</mosaic_0001>

<llo_original>
// kernel: tpu_custom_call.1
$region0: #{tpu_custom_call.1}
  #allocation0 [shape = 'u32[]', space=smem, size = 0x4, offset = 0x4, fixed_abs, tag = 'smem constant byte address 0x4 - core index']
  #allocation1 [shape = 'u32[144,128]{1,0:T(1,128)}', space=vmem, size = 0x12000, scoped, tag = 'internal scratch']
  %s0 = inlined_call_operand.hbm [shape: f32[128,128], index: 0, kind: input, shape index: {}]
  %s1 = inlined_call_operand.hbm [shape: f32[128,128], index: 1, kind: input, shape index: {}]
  %s2 = inlined_call_operand.hbm [shape: f32[128,128], index: 2, kind: input, shape index: {}]
  %s3 = inlined_call_operand.hbm [shape: f32[128,256], index: 3, kind: input, shape index: {}]
  %s4 = inlined_call_operand.hbm [shape: f32[128,256], index: 4, kind: input, shape index: {}]
  %s5 = inlined_call_operand.vmem [shape: f32[1,512], index: 5, kind: input, shape index: {}]
  %s6 = inlined_call_operand.hbm [shape: f32[128,256], index: 6, kind: output, shape index: {}]
  %s7 = sld [smem:[#allocation0]]
  $region54: #{tpu_custom_call.1} parent=0
    _
  %s9 = ssub.s32 1, %s7
  %s10 = scalar_select 0, %s9, %s7
  $region1: #{tpu_custom_call.1} parent=0
    #allocation2 [shape = 'u8[65536]{0}', space=vmem, size = 0x10000, scoped, tag = 'input window, operand 0, single buffered']
    #allocation3 [shape = 's32[1]{0}', space=sflag, size = 0x4, scoped, tag = 'scoped memory for tpu_custom_call.1']
    #allocation4 [shape = 's32[1]{0}', space=sflag, size = 0x4, scoped, tag = 'scoped memory for tpu_custom_call.1']
    #allocation5 [shape = 'u8[65536]{0}', space=vmem, size = 0x10000, scoped, tag = 'input window, operand 1, single buffered']
    #allocation6 [shape = 's32[1]{0}', space=sflag, size = 0x4, scoped, tag = 'scoped memory for tpu_custom_call.1']
    #allocation7 [shape = 'u8[65536]{0}', space=vmem, size = 0x10000, scoped, tag = 'input window, operand 2, single buffered']
    #allocation8 [shape = 'u8[131072]{0}', space=vmem, size = 0x20000, scoped, tag = 'input window, operand 3, single buffered']
    #allocation9 [shape = 's32[1]{0}', space=sflag, size = 0x4, scoped, tag = 'scoped memory for tpu_custom_call.1']
    #allocation10 [shape = 'u8[131072]{0}', space=vmem, size = 0x20000, scoped, tag = 'input window, operand 4, single buffered']
    #allocation11 [shape = 'u8[131072]{0}', space=vmem, size = 0x20000, scoped, tag = 'output window, operand 0, single buffered']
    %11 = vsyncpa [#allocation3], 0
    %12 = vsyncpa [#allocation6], 0
    %13 = vsyncpa [#allocation9], 0
    %14 = vsyncpa [#allocation4], 0
    // Predicated region
    $region2: #{tpu_custom_call.1} parent=1 // pred_check
      _
    $region3: #{tpu_custom_call.1} parent=1 // pred_check_branch
      %16 = sbr.rel (0) target = $region5
    $region4: #{tpu_custom_call.1} parent=1 // pred_region
      %s18 = ssub.s32 2048, 2048
      %19 = vsyncadd [#allocation3], %s18
      %s20 = sshll.u32 [#allocation2], 4
      %s21 = int_to_ptr.vmem [resolvable:$true] %s20
      %26 = dma.hbm_to_vmem [thread:$0]  %s0, 2048, %s21, [#allocation3], 128, 128, 8
    $region5: #{tpu_custom_call.1} parent=1 // pred_fallthru
      _
    // Predicated region
    $region6: #{tpu_custom_call.1} parent=1 // pred_check
      _
    $region7: #{tpu_custom_call.1} parent=1 // pred_check_branch
      %28 = sbr.rel (0) target = $region9
    $region8: #{tpu_custom_call.1} parent=1 // pred_region
      %s30 = ssub.s32 2048, 2048
      %31 = vsyncadd [#allocation6], %s30
      %s32 = sshll.u32 [#allocation5], 4
      %s33 = int_to_ptr.vmem [resolvable:$true] %s32
      %38 = dma.hbm_to_vmem [thread:$0]  %s1, 2048, %s33, [#allocation6], 128, 128, 8
    $region9: #{tpu_custom_call.1} parent=1 // pred_fallthru
      _
    // Predicated region
    $region10: #{tpu_custom_call.1} parent=1 // pred_check
      _
    $region11: #{tpu_custom_call.1} parent=1 // pred_check_branch
      %40 = sbr.rel (0) target = $region13
    $region12: #{tpu_custom_call.1} parent=1 // pred_region
      %s42 = ssub.s32 2048, 2048
      %43 = vsyncadd [#allocation6], %s42
      %s44 = sshll.u32 [#allocation7], 4
      %s45 = int_to_ptr.vmem [resolvable:$true] %s44
      %50 = dma.hbm_to_vmem [thread:$0]  %s2, 2048, %s45, [#allocation6], 128, 128, 8
    $region13: #{tpu_custom_call.1} parent=1 // pred_fallthru
      _
    // Predicated region
    $region14: #{tpu_custom_call.1} parent=1 // pred_check
      _
    $region15: #{tpu_custom_call.1} parent=1 // pred_check_branch
      %52 = sbr.rel (0) target = $region17
    $region16: #{tpu_custom_call.1} parent=1 // pred_region
      %s54 = ssub.s32 4096, 4096
      %55 = vsyncadd [#allocation9], %s54
      %s56 = sshll.u32 [#allocation8], 4
      %s57 = int_to_ptr.vmem [resolvable:$true] %s56
      %62 = dma.hbm_to_vmem [thread:$0]  %s3, 4096, %s57, [#allocation9], 256, 256, 16
    $region17: #{tpu_custom_call.1} parent=1 // pred_fallthru
      _
    // Predicated region
    $region18: #{tpu_custom_call.1} parent=1 // pred_check
      _
    $region19: #{tpu_custom_call.1} parent=1 // pred_check_branch
      %64 = sbr.rel (0) target = $region21
    $region20: #{tpu_custom_call.1} parent=1 // pred_region
      %s66 = ssub.s32 4096, 4096
      %67 = vsyncadd [#allocation9], %s66
      %s68 = sshll.u32 [#allocation10], 4
      %s69 = int_to_ptr.vmem [resolvable:$true] %s68
      %74 = dma.hbm_to_vmem [thread:$0]  %s4, 4096, %s69, [#allocation9], 256, 256, 16
    $region21: #{tpu_custom_call.1} parent=1 // pred_fallthru
      _
    // Predicated region
    $region22: #{tpu_custom_call.1} parent=1 // pred_check
      _
    $region23: #{tpu_custom_call.1} parent=1 // pred_check_branch
      %76 = sbr.rel (0) target = $region25
    $region24: #{tpu_custom_call.1} parent=1 // pred_region
      _
    $region25: #{tpu_custom_call.1} parent=1 // pred_fallthru
      _
    // Predicated region
    $region26: #{tpu_custom_call.1} parent=1 // pred_check
      _
    $region27: #{tpu_custom_call.1} parent=1 // pred_check_branch
      %78 = sbr.rel (0) target = $region29
    $region28: #{tpu_custom_call.1} parent=1 // pred_region
      %79 = dma.done [#allocation3], 2048
    $region29: #{tpu_custom_call.1} parent=1 // pred_fallthru
      _
    // Predicated region
    $region30: #{tpu_custom_call.1} parent=1 // pred_check
      _
    $region31: #{tpu_custom_call.1} parent=1 // pred_check_branch
      %81 = sbr.rel (0) target = $region33
    $region32: #{tpu_custom_call.1} parent=1 // pred_region
      %82 = dma.done [#allocation6], 2048
    $region33: #{tpu_custom_call.1} parent=1 // pred_fallthru
      _
    // Predicated region
    $region34: #{tpu_custom_call.1} parent=1 // pred_check
      _
    $region35: #{tpu_custom_call.1} parent=1 // pred_check_branch
      %84 = sbr.rel (0) target = $region37
    $region36: #{tpu_custom_call.1} parent=1 // pred_region
      %85 = dma.done [#allocation6], 2048
    $region37: #{tpu_custom_call.1} parent=1 // pred_fallthru
      _
    // Predicated region
    $region38: #{tpu_custom_call.1} parent=1 // pred_check
      _
    $region39: #{tpu_custom_call.1} parent=1 // pred_check_branch
      %87 = sbr.rel (0) target = $region41
    $region40: #{tpu_custom_call.1} parent=1 // pred_region
      %88 = dma.done [#allocation9], 4096
    $region41: #{tpu_custom_call.1} parent=1 // pred_fallthru
      _
    // Predicated region
    $region42: #{tpu_custom_call.1} parent=1 // pred_check
      _
    $region43: #{tpu_custom_call.1} parent=1 // pred_check_branch
      %90 = sbr.rel (0) target = $region45
    $region44: #{tpu_custom_call.1} parent=1 // pred_region
      %91 = dma.done [#allocation9], 4096
    $region45: #{tpu_custom_call.1} parent=1 // pred_fallthru
      _
    %v92 = vld [vmem:[#allocation2] sm:$0xff]
    %v93 = vld [vmem:[#allocation2 + $0x8] sm:$0xff]
    %v94 = vld [vmem:[#allocation2 + $0x10] sm:$0xff]
    %v95 = vld [vmem:[#allocation2 + $0x18] sm:$0xff]
    %v96 = vld [vmem:[#allocation2 + $0x20] sm:$0xff]
    %v97 = vld [vmem:[#allocation2 + $0x28] sm:$0xff]
    %v98 = vld [vmem:[#allocation2 + $0x30] sm:$0xff]
    %v99 = vld [vmem:[#allocation2 + $0x38] sm:$0xff]
    %v100 = vld [vmem:[#allocation2 + $0x40] sm:$0xff]
    %v101 = vld [vmem:[#allocation2 + $0x48] sm:$0xff]
    %v102 = vld [vmem:[#allocation2 + $0x50] sm:$0xff]
    %v103 = vld [vmem:[#allocation2 + $0x58] sm:$0xff]
    %v104 = vld [vmem:[#allocation2 + $0x60] sm:$0xff]
    %v105 = vld [vmem:[#allocation2 + $0x68] sm:$0xff]
    %v106 = vld [vmem:[#allocation2 + $0x70] sm:$0xff]
    %v107 = vld [vmem:[#allocation2 + $0x78] sm:$0xff]
    %v108 = vld [vmem:[#allocation8] sm:$0xff]
    %v109 = vld [vmem:[#allocation8 + $0x8] sm:$0xff]
    %v110 = vld [vmem:[#allocation8 + $0x10] sm:$0xff]
    %v111 = vld [vmem:[#allocation8 + $0x18] sm:$0xff]
    %v112 = vld [vmem:[#allocation8 + $0x20] sm:$0xff]
    %v113 = vld [vmem:[#allocation8 + $0x28] sm:$0xff]
    %v114 = vld [vmem:[#allocation8 + $0x30] sm:$0xff]
    %v115 = vld [vmem:[#allocation8 + $0x38] sm:$0xff]
    %v116 = vld [vmem:[#allocation8 + $0x40] sm:$0xff]
    %v117 = vld [vmem:[#allocation8 + $0x48] sm:$0xff]
    %v118 = vld [vmem:[#allocation8 + $0x50] sm:$0xff]
    %v119 = vld [vmem:[#allocation8 + $0x58] sm:$0xff]
    %v120 = vld [vmem:[#allocation8 + $0x60] sm:$0xff]
    %v121 = vld [vmem:[#allocation8 + $0x68] sm:$0xff]
    %v122 = vld [vmem:[#allocation8 + $0x70] sm:$0xff]
    %v123 = vld [vmem:[#allocation8 + $0x78] sm:$0xff]
    %v124 = vld [vmem:[#allocation8 + $0x80] sm:$0xff]
    %v125 = vld [vmem:[#allocation8 + $0x88] sm:$0xff]
    %v126 = vld [vmem:[#allocation8 + $0x90] sm:$0xff]
    %v127 = vld [vmem:[#allocation8 + $0x98] sm:$0xff]
    %v128 = vld [vmem:[#allocation8 + $0xa0] sm:$0xff]
    %v129 = vld [vmem:[#allocation8 + $0xa8] sm:$0xff]
    %v130 = vld [vmem:[#allocation8 + $0xb0] sm:$0xff]
    %v131 = vld [vmem:[#allocation8 + $0xb8] sm:$0xff]
    %v132 = vld [vmem:[#allocation8 + $0xc0] sm:$0xff]
    %v133 = vld [vmem:[#allocation8 + $0xc8] sm:$0xff]
    %v134 = vld [vmem:[#allocation8 + $0xd0] sm:$0xff]
    %v135 = vld [vmem:[#allocation8 + $0xd8] sm:$0xff]
    %v136 = vld [vmem:[#allocation8 + $0xe0] sm:$0xff]
    %v137 = vld [vmem:[#allocation8 + $0xe8] sm:$0xff]
    %v138 = vld [vmem:[#allocation8 + $0xf0] sm:$0xff]
    %v139 = vld [vmem:[#allocation8 + $0xf8] sm:$0xff]
    %140 = vmatprep.subr.mxu0 %v139
    %141 = vmatpush1.msra.mxu0 %v138
    %142 = vmatprep.subr.mxu0 %v137
    %143 = vmatpush1.msra.mxu0 %v136
    %144 = vmatprep.subr.mxu0 %v135
    %145 = vmatpush1.msra.mxu0 %v134
    %146 = vmatprep.subr.mxu0 %v133
    %147 = vmatpush1.msra.mxu0 %v132
    %148 = vmatprep.subr.mxu0 %v131
    %149 = vmatpush1.msra.mxu0 %v130
    %150 = vmatprep.subr.mxu0 %v129
    %151 = vmatpush1.msra.mxu0 %v128
    %152 = vmatprep.subr.mxu0 %v127
    %153 = vmatpush1.msra.mxu0 %v126
    %154 = vmatprep.subr.mxu0 %v125
    %155 = vmatpush1.msra.mxu0 %v124
    %156 = vmatprep.subr.mxu0 %v123
    %157 = vmatpush1.msra.mxu0 %v122
    %158 = vmatprep.subr.mxu0 %v121
    %159 = vmatpush1.msra.mxu0 %v120
    %160 = vmatprep.subr.mxu0 %v119
    %161 = vmatpush1.msra.mxu0 %v118
    %162 = vmatprep.subr.mxu0 %v117
    %163 = vmatpush1.msra.mxu0 %v116
    %164 = vmatprep.subr.mxu0 %v115
    %165 = vmatpush1.msra.mxu0 %v114
    %166 = vmatprep.subr.mxu0 %v113
    %167 = vmatpush1.msra.mxu0 %v112
    %168 = vmatprep.subr.mxu0 %v111
    %169 = vmatpush1.msra.mxu0 %v110
    %170 = vmatprep.subr.mxu0 %v109
    %171 = vmatpush1.msra.mxu0 %v108
    %172 = vmatprep.subr.mxu0 0.0
    %173 = vmatpush2.msra.mxu0 0.0
    %174 = vmatprep.subr.mxu0 0.0
    %175 = vmatpush2.msra.mxu0 0.0
    %176 = vmatprep.subr.mxu0 0.0
    %177 = vmatpush2.msra.mxu0 0.0
    %178 = vmatprep.subr.mxu0 0.0
    %179 = vmatpush2.msra.mxu0 0.0
    %180 = vmatprep.subr.mxu0 0.0
    %181 = vmatpush2.msra.mxu0 0.0
    %182 = vmatprep.subr.mxu0 0.0
    %183 = vmatpush2.msra.mxu0 0.0
    %184 = vmatprep.subr.mxu0 0.0
    %185 = vmatpush2.msra.mxu0 0.0
    %186 = vmatprep.subr.mxu0 0.0
    %187 = vmatpush2.msra.mxu0 0.0
    %188 = vmatprep.subr.mxu0 0.0
    %189 = vmatpush2.msra.mxu0 0.0
    %190 = vmatprep.subr.mxu0 0.0
    %191 = vmatpush2.msra.mxu0 0.0
    %192 = vmatprep.subr.mxu0 0.0
    %193 = vmatpush2.msra.mxu0 0.0
    %194 = vmatprep.subr.mxu0 0.0
    %195 = vmatpush2.msra.mxu0 0.0
    %196 = vmatprep.subr.mxu0 0.0
    %197 = vmatpush2.msra.mxu0 0.0
    %198 = vmatprep.subr.mxu0 0.0
    %199 = vmatpush2.msra.mxu0 0.0
    %200 = vmatprep.subr.mxu0 0.0
    %201 = vmatpush2.msra.mxu0 0.0
    %202 = vmatprep.subr.mxu0 0.0
    %203 = vmatpush2.msra.mxu0 0.0
    %204 = vmatprep.mubr.f32.mxu0 0.0
    %205 = vmatmul.mubr.f32.gmra.mxu0 %v92
    %v206 = vpop.f32.mrf.mxu0
    %v207 = vadd.f32 0.0, %v206
    %v208 = vpop.f32.mrf.mxu0
    %v209 = vadd.f32 0.0, %v208
    %210 = vmatprep.mubr.f32.mxu0 0.0
    %211 = vmatmul.mubr.f32.gmra.mxu0 %v93
    %v212 = vpop.f32.mrf.mxu0
    %v213 = vadd.f32 0.0, %v212
    %v214 = vpop.f32.mrf.mxu0
    %v215 = vadd.f32 0.0, %v214
    %216 = vmatprep.mubr.f32.mxu0 0.0
    %217 = vmatmul.mubr.f32.gmra.mxu0 %v94
    %v218 = vpop.f32.mrf.mxu0
    %v219 = vadd.f32 0.0, %v218
    %v220 = vpop.f32.mrf.mxu0
    %v221 = vadd.f32 0.0, %v220
    %222 = vmatprep.mubr.f32.mxu0 0.0
    %223 = vmatmul.mubr.f32.gmra.mxu0 %v95
    %v224 = vpop.f32.mrf.mxu0
    %v225 = vadd.f32 0.0, %v224
    %v226 = vpop.f32.mrf.mxu0
    %v227 = vadd.f32 0.0, %v226
    %228 = vmatprep.mubr.f32.mxu0 0.0
    %229 = vmatmul.mubr.f32.gmra.mxu0 %v96
    %v230 = vpop.f32.mrf.mxu0
    %v231 = vadd.f32 0.0, %v230
    %v232 = vpop.f32.mrf.mxu0
    %v233 = vadd.f32 0.0, %v232
    %234 = vmatprep.mubr.f32.mxu0 0.0
    %235 = vmatmul.mubr.f32.gmra.mxu0 %v97
    %v236 = vpop.f32.mrf.mxu0
    %v237 = vadd.f32 0.0, %v236
    %v238 = vpop.f32.mrf.mxu0
    %v239 = vadd.f32 0.0, %v238
    %240 = vmatprep.mubr.f32.mxu0 0.0
    %241 = vmatmul.mubr.f32.gmra.mxu0 %v98
    %v242 = vpop.f32.mrf.mxu0
    %v243 = vadd.f32 0.0, %v242
    %v244 = vpop.f32.mrf.mxu0
    %v245 = vadd.f32 0.0, %v244
    %246 = vmatprep.mubr.f32.mxu0 0.0
    %247 = vmatmul.mubr.f32.gmra.mxu0 %v99
    %v248 = vpop.f32.mrf.mxu0
    %v249 = vadd.f32 0.0, %v248
    %v250 = vpop.f32.mrf.mxu0
    %v251 = vadd.f32 0.0, %v250
    %252 = vmatprep.mubr.f32.mxu0 0.0
    %253 = vmatmul.mubr.f32.gmra.mxu0 %v100
    %v254 = vpop.f32.mrf.mxu0
    %v255 = vadd.f32 0.0, %v254
    %v256 = vpop.f32.mrf.mxu0
    %v257 = vadd.f32 0.0, %v256
    %258 = vmatprep.mubr.f32.mxu0 0.0
    %259 = vmatmul.mubr.f32.gmra.mxu0 %v101
    %v260 = vpop.f32.mrf.mxu0
    %v261 = vadd.f32 0.0, %v260
    %v262 = vpop.f32.mrf.mxu0
    %v263 = vadd.f32 0.0, %v262
    %264 = vmatprep.mubr.f32.mxu0 0.0
    %265 = vmatmul.mubr.f32.gmra.mxu0 %v102
    %v266 = vpop.f32.mrf.mxu0
    %v267 = vadd.f32 0.0, %v266
    %v268 = vpop.f32.mrf.mxu0
    %v269 = vadd.f32 0.0, %v268
    %270 = vmatprep.mubr.f32.mxu0 0.0
    %271 = vmatmul.mubr.f32.gmra.mxu0 %v103
    %v272 = vpop.f32.mrf.mxu0
    %v273 = vadd.f32 0.0, %v272
    %v274 = vpop.f32.mrf.mxu0
    %v275 = vadd.f32 0.0, %v274
    %276 = vmatprep.mubr.f32.mxu0 0.0
    %277 = vmatmul.mubr.f32.gmra.mxu0 %v104
    %v278 = vpop.f32.mrf.mxu0
    %v279 = vadd.f32 0.0, %v278
    %v280 = vpop.f32.mrf.mxu0
    %v281 = vadd.f32 0.0, %v280
    %282 = vmatprep.mubr.f32.mxu0 0.0
    %283 = vmatmul.mubr.f32.gmra.mxu0 %v105
    %v284 = vpop.f32.mrf.mxu0
    %v285 = vadd.f32 0.0, %v284
    %v286 = vpop.f32.mrf.mxu0
    %v287 = vadd.f32 0.0, %v286
    %288 = vmatprep.mubr.f32.mxu0 0.0
    %289 = vmatmul.mubr.f32.gmra.mxu0 %v106
    %v290 = vpop.f32.mrf.mxu0
    %v291 = vadd.f32 0.0, %v290
    %v292 = vpop.f32.mrf.mxu0
    %v293 = vadd.f32 0.0, %v292
    %294 = vmatprep.mubr.f32.mxu0 0.0
    %295 = vmatmul.mubr.f32.gmra.mxu0 %v107
    %v296 = vpop.f32.mrf.mxu0
    %v297 = vadd.f32 0.0, %v296
    %v298 = vpop.f32.mrf.mxu0
    %v299 = vadd.f32 0.0, %v298
    %300 = vdwg.mxu0
    %v301 = vld [vmem:[#allocation5] sm:$0xff]
    %v302 = vld [vmem:[#allocation5 + $0x8] sm:$0xff]
    %v303 = vld [vmem:[#allocation5 + $0x10] sm:$0xff]
    %v304 = vld [vmem:[#allocation5 + $0x18] sm:$0xff]
    %v305 = vld [vmem:[#allocation5 + $0x20] sm:$0xff]
    %v306 = vld [vmem:[#allocation5 + $0x28] sm:$0xff]
    %v307 = vld [vmem:[#allocation5 + $0x30] sm:$0xff]
    %v308 = vld [vmem:[#allocation5 + $0x38] sm:$0xff]
    %v309 = vld [vmem:[#allocation5 + $0x40] sm:$0xff]
    %v310 = vld [vmem:[#allocation5 + $0x48] sm:$0xff]
    %v311 = vld [vmem:[#allocation5 + $0x50] sm:$0xff]
    %v312 = vld [vmem:[#allocation5 + $0x58] sm:$0xff]
    %v313 = vld [vmem:[#allocation5 + $0x60] sm:$0xff]
    %v314 = vld [vmem:[#allocation5 + $0x68] sm:$0xff]
    %v315 = vld [vmem:[#allocation5 + $0x70] sm:$0xff]
    %v316 = vld [vmem:[#allocation5 + $0x78] sm:$0xff]
    %v317 = vld [vmem:[#allocation10] sm:$0xff]
    %v318 = vld [vmem:[#allocation10 + $0x8] sm:$0xff]
    %v319 = vld [vmem:[#allocation10 + $0x10] sm:$0xff]
    %v320 = vld [vmem:[#allocation10 + $0x18] sm:$0xff]
    %v321 = vld [vmem:[#allocation10 + $0x20] sm:$0xff]
    %v322 = vld [vmem:[#allocation10 + $0x28] sm:$0xff]
    %v323 = vld [vmem:[#allocation10 + $0x30] sm:$0xff]
    %v324 = vld [vmem:[#allocation10 + $0x38] sm:$0xff]
    %v325 = vld [vmem:[#allocation10 + $0x40] sm:$0xff]
    %v326 = vld [vmem:[#allocation10 + $0x48] sm:$0xff]
    %v327 = vld [vmem:[#allocation10 + $0x50] sm:$0xff]
    %v328 = vld [vmem:[#allocation10 + $0x58] sm:$0xff]
    %v329 = vld [vmem:[#allocation10 + $0x60] sm:$0xff]
    %v330 = vld [vmem:[#allocation10 + $0x68] sm:$0xff]
    %v331 = vld [vmem:[#allocation10 + $0x70] sm:$0xff]
    %v332 = vld [vmem:[#allocation10 + $0x78] sm:$0xff]
    %v333 = vld [vmem:[#allocation10 + $0x80] sm:$0xff]
    %v334 = vld [vmem:[#allocation10 + $0x88] sm:$0xff]
    %v335 = vld [vmem:[#allocation10 + $0x90] sm:$0xff]
    %v336 = vld [vmem:[#allocation10 + $0x98] sm:$0xff]
    %v337 = vld [vmem:[#allocation10 + $0xa0] sm:$0xff]
    %v338 = vld [vmem:[#allocation10 + $0xa8] sm:$0xff]
    %v339 = vld [vmem:[#allocation10 + $0xb0] sm:$0xff]
    %v340 = vld [vmem:[#allocation10 + $0xb8] sm:$0xff]
    %v341 = vld [vmem:[#allocation10 + $0xc0] sm:$0xff]
    %v342 = vld [vmem:[#allocation10 + $0xc8] sm:$0xff]
    %v343 = vld [vmem:[#allocation10 + $0xd0] sm:$0xff]
    %v344 = vld [vmem:[#allocation10 + $0xd8] sm:$0xff]
    %v345 = vld [vmem:[#allocation10 + $0xe0] sm:$0xff]
    %v346 = vld [vmem:[#allocation10 + $0xe8] sm:$0xff]
    %v347 = vld [vmem:[#allocation10 + $0xf0] sm:$0xff]
    %v348 = vld [vmem:[#allocation10 + $0xf8] sm:$0xff]
    %349 = vmatprep.subr.mxu0 %v348
    %350 = vmatpush1.msra.mxu0 %v347
    %351 = vmatprep.subr.mxu0 %v346
    %352 = vmatpush1.msra.mxu0 %v345
    %353 = vmatprep.subr.mxu0 %v344
    %354 = vmatpush1.msra.mxu0 %v343
    %355 = vmatprep.subr.mxu0 %v342
    %356 = vmatpush1.msra.mxu0 %v341
    %357 = vmatprep.subr.mxu0 %v340
    %358 = vmatpush1.msra.mxu0 %v339
    %359 = vmatprep.subr.mxu0 %v338
    %360 = vmatpush1.msra.mxu0 %v337
    %361 = vmatprep.subr.mxu0 %v336
    %362 = vmatpush1.msra.mxu0 %v335
    %363 = vmatprep.subr.mxu0 %v334
    %364 = vmatpush1.msra.mxu0 %v333
    %365 = vmatprep.subr.mxu0 %v332
    %366 = vmatpush1.msra.mxu0 %v331
    %367 = vmatprep.subr.mxu0 %v330
    %368 = vmatpush1.msra.mxu0 %v329
    %369 = vmatprep.subr.mxu0 %v328
    %370 = vmatpush1.msra.mxu0 %v327
    %371 = vmatprep.subr.mxu0 %v326
    %372 = vmatpush1.msra.mxu0 %v325
    %373 = vmatprep.subr.mxu0 %v324
    %374 = vmatpush1.msra.mxu0 %v323
    %375 = vmatprep.subr.mxu0 %v322
    %376 = vmatpush1.msra.mxu0 %v321
    %377 = vmatprep.subr.mxu0 %v320
    %378 = vmatpush1.msra.mxu0 %v319
    %379 = vmatprep.subr.mxu0 %v318
    %380 = vmatpush1.msra.mxu0 %v317
    %381 = vmatprep.subr.mxu0 0.0
    %382 = vmatpush2.msra.mxu0 0.0
    %383 = vmatprep.subr.mxu0 0.0
    %384 = vmatpush2.msra.mxu0 0.0
    %385 = vmatprep.subr.mxu0 0.0
    %386 = vmatpush2.msra.mxu0 0.0
    %387 = vmatprep.subr.mxu0 0.0
    %388 = vmatpush2.msra.mxu0 0.0
    %389 = vmatprep.subr.mxu0 0.0
    %390 = vmatpush2.msra.mxu0 0.0
    %391 = vmatprep.subr.mxu0 0.0
    %392 = vmatpush2.msra.mxu0 0.0
    %393 = vmatprep.subr.mxu0 0.0
    %394 = vmatpush2.msra.mxu0 0.0
    %395 = vmatprep.subr.mxu0 0.0
    %396 = vmatpush2.msra.mxu0 0.0
    %397 = vmatprep.subr.mxu0 0.0
    %398 = vmatpush2.msra.mxu0 0.0
    %399 = vmatprep.subr.mxu0 0.0
    %400 = vmatpush2.msra.mxu0 0.0
    %401 = vmatprep.subr.mxu0 0.0
    %402 = vmatpush2.msra.mxu0 0.0
    %403 = vmatprep.subr.mxu0 0.0
    %404 = vmatpush2.msra.mxu0 0.0
    %405 = vmatprep.subr.mxu0 0.0
    %406 = vmatpush2.msra.mxu0 0.0
    %407 = vmatprep.subr.mxu0 0.0
    %408 = vmatpush2.msra.mxu0 0.0
    %409 = vmatprep.subr.mxu0 0.0
    %410 = vmatpush2.msra.mxu0 0.0
    %411 = vmatprep.subr.mxu0 0.0
    %412 = vmatpush2.msra.mxu0 0.0
    %413 = vmatprep.mubr.f32.mxu0 0.0
    %414 = vmatmul.mubr.f32.gmra.mxu0 %v301
    %v415 = vpop.f32.mrf.mxu0
    %v416 = vadd.f32 0.0, %v415
    %v417 = vpop.f32.mrf.mxu0
    %v418 = vadd.f32 0.0, %v417
    %419 = vmatprep.mubr.f32.mxu0 0.0
    %420 = vmatmul.mubr.f32.gmra.mxu0 %v302
    %v421 = vpop.f32.mrf.mxu0
    %v422 = vadd.f32 0.0, %v421
    %v423 = vpop.f32.mrf.mxu0
    %v424 = vadd.f32 0.0, %v423
    %425 = vmatprep.mubr.f32.mxu0 0.0
    %426 = vmatmul.mubr.f32.gmra.mxu0 %v303
    %v427 = vpop.f32.mrf.mxu0
    %v428 = vadd.f32 0.0, %v427
    %v429 = vpop.f32.mrf.mxu0
    %v430 = vadd.f32 0.0, %v429
    %431 = vmatprep.mubr.f32.mxu0 0.0
    %432 = vmatmul.mubr.f32.gmra.mxu0 %v304
    %v433 = vpop.f32.mrf.mxu0
    %v434 = vadd.f32 0.0, %v433
    %v435 = vpop.f32.mrf.mxu0
    %v436 = vadd.f32 0.0, %v435
    %437 = vmatprep.mubr.f32.mxu0 0.0
    %438 = vmatmul.mubr.f32.gmra.mxu0 %v305
    %v439 = vpop.f32.mrf.mxu0
    %v440 = vadd.f32 0.0, %v439
    %v441 = vpop.f32.mrf.mxu0
    %v442 = vadd.f32 0.0, %v441
    %443 = vmatprep.mubr.f32.mxu0 0.0
    %444 = vmatmul.mubr.f32.gmra.mxu0 %v306
    %v445 = vpop.f32.mrf.mxu0
    %v446 = vadd.f32 0.0, %v445
    %v447 = vpop.f32.mrf.mxu0
    %v448 = vadd.f32 0.0, %v447
    %449 = vmatprep.mubr.f32.mxu0 0.0
    %450 = vmatmul.mubr.f32.gmra.mxu0 %v307
    %v451 = vpop.f32.mrf.mxu0
    %v452 = vadd.f32 0.0, %v451
    %v453 = vpop.f32.mrf.mxu0
    %v454 = vadd.f32 0.0, %v453
    %455 = vmatprep.mubr.f32.mxu0 0.0
    %456 = vmatmul.mubr.f32.gmra.mxu0 %v308
    %v457 = vpop.f32.mrf.mxu0
    %v458 = vadd.f32 0.0, %v457
    %v459 = vpop.f32.mrf.mxu0
    %v460 = vadd.f32 0.0, %v459
    %461 = vmatprep.mubr.f32.mxu0 0.0
    %462 = vmatmul.mubr.f32.gmra.mxu0 %v309
    %v463 = vpop.f32.mrf.mxu0
    %v464 = vadd.f32 0.0, %v463
    %v465 = vpop.f32.mrf.mxu0
    %v466 = vadd.f32 0.0, %v465
    %467 = vmatprep.mubr.f32.mxu0 0.0
    %468 = vmatmul.mubr.f32.gmra.mxu0 %v310
    %v469 = vpop.f32.mrf.mxu0
    %v470 = vadd.f32 0.0, %v469
    %v471 = vpop.f32.mrf.mxu0
    %v472 = vadd.f32 0.0, %v471
    %473 = vmatprep.mubr.f32.mxu0 0.0
    %474 = vmatmul.mubr.f32.gmra.mxu0 %v311
    %v475 = vpop.f32.mrf.mxu0
    %v476 = vadd.f32 0.0, %v475
    %v477 = vpop.f32.mrf.mxu0
    %v478 = vadd.f32 0.0, %v477
    %479 = vmatprep.mubr.f32.mxu0 0.0
    %480 = vmatmul.mubr.f32.gmra.mxu0 %v312
    %v481 = vpop.f32.mrf.mxu0
    %v482 = vadd.f32 0.0, %v481
    %v483 = vpop.f32.mrf.mxu0
    %v484 = vadd.f32 0.0, %v483
    %485 = vmatprep.mubr.f32.mxu0 0.0
    %486 = vmatmul.mubr.f32.gmra.mxu0 %v313
    %v487 = vpop.f32.mrf.mxu0
    %v488 = vadd.f32 0.0, %v487
    %v489 = vpop.f32.mrf.mxu0
    %v490 = vadd.f32 0.0, %v489
    %491 = vmatprep.mubr.f32.mxu0 0.0
    %492 = vmatmul.mubr.f32.gmra.mxu0 %v314
    %v493 = vpop.f32.mrf.mxu0
    %v494 = vadd.f32 0.0, %v493
    %v495 = vpop.f32.mrf.mxu0
    %v496 = vadd.f32 0.0, %v495
    %497 = vmatprep.mubr.f32.mxu0 0.0
    %498 = vmatmul.mubr.f32.gmra.mxu0 %v315
    %v499 = vpop.f32.mrf.mxu0
    %v500 = vadd.f32 0.0, %v499
    %v501 = vpop.f32.mrf.mxu0
    %v502 = vadd.f32 0.0, %v501
    %503 = vmatprep.mubr.f32.mxu0 0.0
    %504 = vmatmul.mubr.f32.gmra.mxu0 %v316
    %v505 = vpop.f32.mrf.mxu0
    %v506 = vadd.f32 0.0, %v505
    %v507 = vpop.f32.mrf.mxu0
    %v508 = vadd.f32 0.0, %v507
    %509 = vdwg.mxu0
    %v510 = vld [vmem:[#allocation7] sm:$0xff]
    %v511 = vld [vmem:[#allocation7 + $0x8] sm:$0xff]
    %v512 = vld [vmem:[#allocation7 + $0x10] sm:$0xff]
    %v513 = vld [vmem:[#allocation7 + $0x18] sm:$0xff]
    %v514 = vld [vmem:[#allocation7 + $0x20] sm:$0xff]
    %v515 = vld [vmem:[#allocation7 + $0x28] sm:$0xff]
    %v516 = vld [vmem:[#allocation7 + $0x30] sm:$0xff]
    %v517 = vld [vmem:[#allocation7 + $0x38] sm:$0xff]
    %v518 = vld [vmem:[#allocation7 + $0x40] sm:$0xff]
    %v519 = vld [vmem:[#allocation7 + $0x48] sm:$0xff]
    %v520 = vld [vmem:[#allocation7 + $0x50] sm:$0xff]
    %v521 = vld [vmem:[#allocation7 + $0x58] sm:$0xff]
    %v522 = vld [vmem:[#allocation7 + $0x60] sm:$0xff]
    %v523 = vld [vmem:[#allocation7 + $0x68] sm:$0xff]
    %v524 = vld [vmem:[#allocation7 + $0x70] sm:$0xff]
    %v525 = vld [vmem:[#allocation7 + $0x78] sm:$0xff]
    %v526 = vld [vmem:[%s5] sm:$0xf]
    %v528 = vlaneseq
    %v529 = vshrl.u32 %v528, 7
    %v530 = vsub.s32 0, %v529
    %v531 = vrot.slane %v526, %v530
    %v532 = vlaneseq
    %v533 = vshrl.u32 %v532, 7
    %v534 = vsub.s32 1, %v533
    %v535 = vrot.slane %v526, %v534
    %v536 = vlaneseq
    %v537 = vshrl.u32 %v536, 7
    %v538 = vsub.s32 2, %v537
    %v539 = vrot.slane %v526, %v538
    %v540 = vlaneseq
    %v541 = vshrl.u32 %v540, 7
    %v542 = vsub.s32 3, %v541
    %v543 = vrot.slane %v526, %v542
    %548 = vmatprep.subr.mxu0 %v299
    %549 = vmatpush1.msra.mxu0 %v297
    %550 = vmatprep.subr.mxu0 %v293
    %551 = vmatpush1.msra.mxu0 %v291
    %552 = vmatprep.subr.mxu0 %v287
    %553 = vmatpush1.msra.mxu0 %v285
    %554 = vmatprep.subr.mxu0 %v281
    %555 = vmatpush1.msra.mxu0 %v279
    %556 = vmatprep.subr.mxu0 %v275
    %557 = vmatpush1.msra.mxu0 %v273
    %558 = vmatprep.subr.mxu0 %v269
    %559 = vmatpush1.msra.mxu0 %v267
    %560 = vmatprep.subr.mxu0 %v263
    %561 = vmatpush1.msra.mxu0 %v261
    %562 = vmatprep.subr.mxu0 %v257
    %563 = vmatpush1.msra.mxu0 %v255
    %564 = vmatprep.subr.mxu0 %v251
    %565 = vmatpush1.msra.mxu0 %v249
    %566 = vmatprep.subr.mxu0 %v245
    %567 = vmatpush1.msra.mxu0 %v243
    %568 = vmatprep.subr.mxu0 %v239
    %569 = vmatpush1.msra.mxu0 %v237
    %570 = vmatprep.subr.mxu0 %v233
    %571 = vmatpush1.msra.mxu0 %v231
    %572 = vmatprep.subr.mxu0 %v227
    %573 = vmatpush1.msra.mxu0 %v225
    %574 = vmatprep.subr.mxu0 %v221
    %575 = vmatpush1.msra.mxu0 %v219
    %576 = vmatprep.subr.mxu0 %v215
    %577 = vmatpush1.msra.mxu0 %v213
    %578 = vmatprep.subr.mxu0 %v209
    %579 = vmatpush1.msra.mxu0 %v207
    %580 = vmatprep.subr.mxu0 0.0
    %581 = vmatpush2.msra.mxu0 0.0
    %582 = vmatprep.subr.mxu0 0.0
    %583 = vmatpush2.msra.mxu0 0.0
    %584 = vmatprep.subr.mxu0 0.0
    %585 = vmatpush2.msra.mxu0 0.0
    %586 = vmatprep.subr.mxu0 0.0
    %587 = vmatpush2.msra.mxu0 0.0
    %588 = vmatprep.subr.mxu0 0.0
    %589 = vmatpush2.msra.mxu0 0.0
    %590 = vmatprep.subr.mxu0 0.0
    %591 = vmatpush2.msra.mxu0 0.0
    %592 = vmatprep.subr.mxu0 0.0
    %593 = vmatpush2.msra.mxu0 0.0
    %594 = vmatprep.subr.mxu0 0.0
    %595 = vmatpush2.msra.mxu0 0.0
    %596 = vmatprep.subr.mxu0 0.0
    %597 = vmatpush2.msra.mxu0 0.0
    %598 = vmatprep.subr.mxu0 0.0
    %599 = vmatpush2.msra.mxu0 0.0
    %600 = vmatprep.subr.mxu0 0.0
    %601 = vmatpush2.msra.mxu0 0.0
    %602 = vmatprep.subr.mxu0 0.0
    %603 = vmatpush2.msra.mxu0 0.0
    %604 = vmatprep.subr.mxu0 0.0
    %605 = vmatpush2.msra.mxu0 0.0
    %606 = vmatprep.subr.mxu0 0.0
    %607 = vmatpush2.msra.mxu0 0.0
    %608 = vmatprep.subr.mxu0 0.0
    %609 = vmatpush2.msra.mxu0 0.0
    %610 = vmatprep.subr.mxu0 0.0
    %611 = vmatpush2.msra.mxu0 0.0
    %612 = vmatprep.mubr.f32.mxu0 0.0
    %613 = vmatmul.mubr.f32.gmra.mxu0 %v510
    %v614 = vpop.f32.mrf.mxu0
    %v615 = vadd.f32 %v531, %v614
    %v616 = vpop.f32.mrf.mxu0
    %v617 = vadd.f32 %v535, %v616
    %618 = vmatprep.mubr.f32.mxu0 0.0
    %619 = vmatmul.mubr.f32.gmra.mxu0 %v511
    %v620 = vpop.f32.mrf.mxu0
    %v621 = vadd.f32 %v531, %v620
    %v622 = vpop.f32.mrf.mxu0
    %v623 = vadd.f32 %v535, %v622
    %624 = vmatprep.mubr.f32.mxu0 0.0
    %625 = vmatmul.mubr.f32.gmra.mxu0 %v512
    %v626 = vpop.f32.mrf.mxu0
    %v627 = vadd.f32 %v531, %v626
    %v628 = vpop.f32.mrf.mxu0
    %v629 = vadd.f32 %v535, %v628
    %630 = vmatprep.mubr.f32.mxu0 0.0
    %631 = vmatmul.mubr.f32.gmra.mxu0 %v513
    %v632 = vpop.f32.mrf.mxu0
    %v633 = vadd.f32 %v531, %v632
    %v634 = vpop.f32.mrf.mxu0
    %v635 = vadd.f32 %v535, %v634
    %636 = vmatprep.mubr.f32.mxu0 0.0
    %637 = vmatmul.mubr.f32.gmra.mxu0 %v514
    %v638 = vpop.f32.mrf.mxu0
    %v639 = vadd.f32 %v531, %v638
    %v640 = vpop.f32.mrf.mxu0
    %v641 = vadd.f32 %v535, %v640
    %642 = vmatprep.mubr.f32.mxu0 0.0
    %643 = vmatmul.mubr.f32.gmra.mxu0 %v515
    %v644 = vpop.f32.mrf.mxu0
    %v645 = vadd.f32 %v531, %v644
    %v646 = vpop.f32.mrf.mxu0
    %v647 = vadd.f32 %v535, %v646
    %648 = vmatprep.mubr.f32.mxu0 0.0
    %649 = vmatmul.mubr.f32.gmra.mxu0 %v516
    %v650 = vpop.f32.mrf.mxu0
    %v651 = vadd.f32 %v531, %v650
    %v652 = vpop.f32.mrf.mxu0
    %v653 = vadd.f32 %v535, %v652
    %654 = vmatprep.mubr.f32.mxu0 0.0
    %655 = vmatmul.mubr.f32.gmra.mxu0 %v517
    %v656 = vpop.f32.mrf.mxu0
    %v657 = vadd.f32 %v531, %v656
    %v658 = vpop.f32.mrf.mxu0
    %v659 = vadd.f32 %v535, %v658
    %660 = vmatprep.mubr.f32.mxu0 0.0
    %661 = vmatmul.mubr.f32.gmra.mxu0 %v518
    %v662 = vpop.f32.mrf.mxu0
    %v663 = vadd.f32 %v531, %v662
    %v664 = vpop.f32.mrf.mxu0
    %v665 = vadd.f32 %v535, %v664
    %666 = vmatprep.mubr.f32.mxu0 0.0
    %667 = vmatmul.mubr.f32.gmra.mxu0 %v519
    %v668 = vpop.f32.mrf.mxu0
    %v669 = vadd.f32 %v531, %v668
    %v670 = vpop.f32.mrf.mxu0
    %v671 = vadd.f32 %v535, %v670
    %672 = vmatprep.mubr.f32.mxu0 0.0
    %673 = vmatmul.mubr.f32.gmra.mxu0 %v520
    %v674 = vpop.f32.mrf.mxu0
    %v675 = vadd.f32 %v531, %v674
    %v676 = vpop.f32.mrf.mxu0
    %v677 = vadd.f32 %v535, %v676
    %678 = vmatprep.mubr.f32.mxu0 0.0
    %679 = vmatmul.mubr.f32.gmra.mxu0 %v521
    %v680 = vpop.f32.mrf.mxu0
    %v681 = vadd.f32 %v531, %v680
    %v682 = vpop.f32.mrf.mxu0
    %v683 = vadd.f32 %v535, %v682
    %684 = vmatprep.mubr.f32.mxu0 0.0
    %685 = vmatmul.mubr.f32.gmra.mxu0 %v522
    %v686 = vpop.f32.mrf.mxu0
    %v687 = vadd.f32 %v531, %v686
    %v688 = vpop.f32.mrf.mxu0
    %v689 = vadd.f32 %v535, %v688
    %690 = vmatprep.mubr.f32.mxu0 0.0
    %691 = vmatmul.mubr.f32.gmra.mxu0 %v523
    %v692 = vpop.f32.mrf.mxu0
    %v693 = vadd.f32 %v531, %v692
    %v694 = vpop.f32.mrf.mxu0
    %v695 = vadd.f32 %v535, %v694
    %696 = vmatprep.mubr.f32.mxu0 0.0
    %697 = vmatmul.mubr.f32.gmra.mxu0 %v524
    %v698 = vpop.f32.mrf.mxu0
    %v699 = vadd.f32 %v531, %v698
    %v700 = vpop.f32.mrf.mxu0
    %v701 = vadd.f32 %v535, %v700
    %702 = vmatprep.mubr.f32.mxu0 0.0
    %703 = vmatmul.mubr.f32.gmra.mxu0 %v525
    %v704 = vpop.f32.mrf.mxu0
    %v705 = vadd.f32 %v531, %v704
    %v706 = vpop.f32.mrf.mxu0
    %v707 = vadd.f32 %v535, %v706
    %708 = vdwg.mxu0
    %709 = vmatprep.subr.mxu0 %v508
    %710 = vmatpush1.msra.mxu0 %v506
    %711 = vmatprep.subr.mxu0 %v502
    %712 = vmatpush1.msra.mxu0 %v500
    %713 = vmatprep.subr.mxu0 %v496
    %714 = vmatpush1.msra.mxu0 %v494
    %715 = vmatprep.subr.mxu0 %v490
    %716 = vmatpush1.msra.mxu0 %v488
    %717 = vmatprep.subr.mxu0 %v484
    %718 = vmatpush1.msra.mxu0 %v482
    %719 = vmatprep.subr.mxu0 %v478
    %720 = vmatpush1.msra.mxu0 %v476
    %721 = vmatprep.subr.mxu0 %v472
    %722 = vmatpush1.msra.mxu0 %v470
    %723 = vmatprep.subr.mxu0 %v466
    %724 = vmatpush1.msra.mxu0 %v464
    %725 = vmatprep.subr.mxu0 %v460
    %726 = vmatpush1.msra.mxu0 %v458
    %727 = vmatprep.subr.mxu0 %v454
    %728 = vmatpush1.msra.mxu0 %v452
    %729 = vmatprep.subr.mxu0 %v448
    %730 = vmatpush1.msra.mxu0 %v446
    %731 = vmatprep.subr.mxu0 %v442
    %732 = vmatpush1.msra.mxu0 %v440
    %733 = vmatprep.subr.mxu0 %v436
    %734 = vmatpush1.msra.mxu0 %v434
    %735 = vmatprep.subr.mxu0 %v430
    %736 = vmatpush1.msra.mxu0 %v428
    %737 = vmatprep.subr.mxu0 %v424
    %738 = vmatpush1.msra.mxu0 %v422
    %739 = vmatprep.subr.mxu0 %v418
    %740 = vmatpush1.msra.mxu0 %v416
    %741 = vmatprep.subr.mxu0 0.0
    %742 = vmatpush2.msra.mxu0 0.0
    %743 = vmatprep.subr.mxu0 0.0
    %744 = vmatpush2.msra.mxu0 0.0
    %745 = vmatprep.subr.mxu0 0.0
    %746 = vmatpush2.msra.mxu0 0.0
    %747 = vmatprep.subr.mxu0 0.0
    %748 = vmatpush2.msra.mxu0 0.0
    %749 = vmatprep.subr.mxu0 0.0
    %750 = vmatpush2.msra.mxu0 0.0
    %751 = vmatprep.subr.mxu0 0.0
    %752 = vmatpush2.msra.mxu0 0.0
    %753 = vmatprep.subr.mxu0 0.0
    %754 = vmatpush2.msra.mxu0 0.0
    %755 = vmatprep.subr.mxu0 0.0
    %756 = vmatpush2.msra.mxu0 0.0
    %757 = vmatprep.subr.mxu0 0.0
    %758 = vmatpush2.msra.mxu0 0.0
    %759 = vmatprep.subr.mxu0 0.0
    %760 = vmatpush2.msra.mxu0 0.0
    %761 = vmatprep.subr.mxu0 0.0
    %762 = vmatpush2.msra.mxu0 0.0
    %763 = vmatprep.subr.mxu0 0.0
    %764 = vmatpush2.msra.mxu0 0.0
    %765 = vmatprep.subr.mxu0 0.0
    %766 = vmatpush2.msra.mxu0 0.0
    %767 = vmatprep.subr.mxu0 0.0
    %768 = vmatpush2.msra.mxu0 0.0
    %769 = vmatprep.subr.mxu0 0.0
    %770 = vmatpush2.msra.mxu0 0.0
    %771 = vmatprep.subr.mxu0 0.0
    %772 = vmatpush2.msra.mxu0 0.0
    %773 = vmatprep.mubr.f32.mxu0 0.0
    %774 = vmatmul.mubr.f32.gmra.mxu0 %v510
    %v775 = vpop.f32.mrf.mxu0
    %v776 = vadd.f32 %v539, %v775
    %v777 = vpop.f32.mrf.mxu0
    %v778 = vadd.f32 %v543, %v777
    %779 = vmatprep.mubr.f32.mxu0 0.0
    %780 = vmatmul.mubr.f32.gmra.mxu0 %v511
    %v781 = vpop.f32.mrf.mxu0
    %v782 = vadd.f32 %v539, %v781
    %v783 = vpop.f32.mrf.mxu0
    %v784 = vadd.f32 %v543, %v783
    %785 = vmatprep.mubr.f32.mxu0 0.0
    %786 = vmatmul.mubr.f32.gmra.mxu0 %v512
    %v787 = vpop.f32.mrf.mxu0
    %v788 = vadd.f32 %v539, %v787
    %v789 = vpop.f32.mrf.mxu0
    %v790 = vadd.f32 %v543, %v789
    %791 = vmatprep.mubr.f32.mxu0 0.0
    %792 = vmatmul.mubr.f32.gmra.mxu0 %v513
    %v793 = vpop.f32.mrf.mxu0
    %v794 = vadd.f32 %v539, %v793
    %v795 = vpop.f32.mrf.mxu0
    %v796 = vadd.f32 %v543, %v795
    %797 = vmatprep.mubr.f32.mxu0 0.0
    %798 = vmatmul.mubr.f32.gmra.mxu0 %v514
    %v799 = vpop.f32.mrf.mxu0
    %v800 = vadd.f32 %v539, %v799
    %v801 = vpop.f32.mrf.mxu0
    %v802 = vadd.f32 %v543, %v801
    %803 = vmatprep.mubr.f32.mxu0 0.0
    %804 = vmatmul.mubr.f32.gmra.mxu0 %v515
    %v805 = vpop.f32.mrf.mxu0
    %v806 = vadd.f32 %v539, %v805
    %v807 = vpop.f32.mrf.mxu0
    %v808 = vadd.f32 %v543, %v807
    %809 = vmatprep.mubr.f32.mxu0 0.0
    %810 = vmatmul.mubr.f32.gmra.mxu0 %v516
    %v811 = vpop.f32.mrf.mxu0
    %v812 = vadd.f32 %v539, %v811
    %v813 = vpop.f32.mrf.mxu0
    %v814 = vadd.f32 %v543, %v813
    %815 = vmatprep.mubr.f32.mxu0 0.0
    %816 = vmatmul.mubr.f32.gmra.mxu0 %v517
    %v817 = vpop.f32.mrf.mxu0
    %v818 = vadd.f32 %v539, %v817
    %v819 = vpop.f32.mrf.mxu0
    %v820 = vadd.f32 %v543, %v819
    %821 = vmatprep.mubr.f32.mxu0 0.0
    %822 = vmatmul.mubr.f32.gmra.mxu0 %v518
    %v823 = vpop.f32.mrf.mxu0
    %v824 = vadd.f32 %v539, %v823
    %v825 = vpop.f32.mrf.mxu0
    %v826 = vadd.f32 %v543, %v825
    %827 = vmatprep.mubr.f32.mxu0 0.0
    %828 = vmatmul.mubr.f32.gmra.mxu0 %v519
    %v829 = vpop.f32.mrf.mxu0
    %v830 = vadd.f32 %v539, %v829
    %v831 = vpop.f32.mrf.mxu0
    %v832 = vadd.f32 %v543, %v831
    %833 = vmatprep.mubr.f32.mxu0 0.0
    %834 = vmatmul.mubr.f32.gmra.mxu0 %v520
    %v835 = vpop.f32.mrf.mxu0
    %v836 = vadd.f32 %v539, %v835
    %v837 = vpop.f32.mrf.mxu0
    %v838 = vadd.f32 %v543, %v837
    %839 = vmatprep.mubr.f32.mxu0 0.0
    %840 = vmatmul.mubr.f32.gmra.mxu0 %v521
    %v841 = vpop.f32.mrf.mxu0
    %v842 = vadd.f32 %v539, %v841
    %v843 = vpop.f32.mrf.mxu0
    %v844 = vadd.f32 %v543, %v843
    %845 = vmatprep.mubr.f32.mxu0 0.0
    %846 = vmatmul.mubr.f32.gmra.mxu0 %v522
    %v847 = vpop.f32.mrf.mxu0
    %v848 = vadd.f32 %v539, %v847
    %v849 = vpop.f32.mrf.mxu0
    %v850 = vadd.f32 %v543, %v849
    %851 = vmatprep.mubr.f32.mxu0 0.0
    %852 = vmatmul.mubr.f32.gmra.mxu0 %v523
    %v853 = vpop.f32.mrf.mxu0
    %v854 = vadd.f32 %v539, %v853
    %v855 = vpop.f32.mrf.mxu0
    %v856 = vadd.f32 %v543, %v855
    %857 = vmatprep.mubr.f32.mxu0 0.0
    %858 = vmatmul.mubr.f32.gmra.mxu0 %v524
    %v859 = vpop.f32.mrf.mxu0
    %v860 = vadd.f32 %v539, %v859
    %v861 = vpop.f32.mrf.mxu0
    %v862 = vadd.f32 %v543, %v861
    %863 = vmatprep.mubr.f32.mxu0 0.0
    %864 = vmatmul.mubr.f32.gmra.mxu0 %v525
    %v865 = vpop.f32.mrf.mxu0
    %v866 = vadd.f32 %v539, %v865
    %v867 = vpop.f32.mrf.mxu0
    %v868 = vadd.f32 %v543, %v867
    %869 = vdwg.mxu0
    %v870 = vxor.u32 %v615, 2147483648
    %v871 = vxor.u32 %v617, 2147483648
    %v872 = vxor.u32 %v621, 2147483648
    %v873 = vxor.u32 %v623, 2147483648
    %v874 = vxor.u32 %v627, 2147483648
    %v875 = vxor.u32 %v629, 2147483648
    %v876 = vxor.u32 %v633, 2147483648
    %v877 = vxor.u32 %v635, 2147483648
    %v878 = vxor.u32 %v639, 2147483648
    %v879 = vxor.u32 %v641, 2147483648
    %v880 = vxor.u32 %v645, 2147483648
    %v881 = vxor.u32 %v647, 2147483648
    %v882 = vxor.u32 %v651, 2147483648
    %v883 = vxor.u32 %v653, 2147483648
    %v884 = vxor.u32 %v657, 2147483648
    %v885 = vxor.u32 %v659, 2147483648
    %v886 = vxor.u32 %v663, 2147483648
    %v887 = vxor.u32 %v665, 2147483648
    %v888 = vxor.u32 %v669, 2147483648
    %v889 = vxor.u32 %v671, 2147483648
    %v890 = vxor.u32 %v675, 2147483648
    %v891 = vxor.u32 %v677, 2147483648
    %v892 = vxor.u32 %v681, 2147483648
    %v893 = vxor.u32 %v683, 2147483648
    %v894 = vxor.u32 %v687, 2147483648
    %v895 = vxor.u32 %v689, 2147483648
    %v896 = vxor.u32 %v693, 2147483648
    %v897 = vxor.u32 %v695, 2147483648
    %v898 = vxor.u32 %v699, 2147483648
    %v899 = vxor.u32 %v701, 2147483648
    %v900 = vxor.u32 %v705, 2147483648
    %v901 = vxor.u32 %v707, 2147483648
    %v902 = vmul.f32 %v870, 1.442695
    %v903 = vpow.pop %v902
    %v904 = vmul.f32 %v871, 1.442695
    %v905 = vpow.pop %v904
    %v906 = vmul.f32 %v872, 1.442695
    %v907 = vpow.pop %v906
    %v908 = vmul.f32 %v873, 1.442695
    %v909 = vpow.pop %v908
    %v910 = vmul.f32 %v874, 1.442695
    %v911 = vpow.pop %v910
    %v912 = vmul.f32 %v875, 1.442695
    %v913 = vpow.pop %v912
    %v914 = vmul.f32 %v876, 1.442695
    %v915 = vpow.pop %v914
    %v916 = vmul.f32 %v877, 1.442695
    %v917 = vpow.pop %v916
    %v918 = vmul.f32 %v878, 1.442695
    %v919 = vpow.pop %v918
    %v920 = vmul.f32 %v879, 1.442695
    %v921 = vpow.pop %v920
    %v922 = vmul.f32 %v880, 1.442695
    %v923 = vpow.pop %v922
    %v924 = vmul.f32 %v881, 1.442695
    %v925 = vpow.pop %v924
    %v926 = vmul.f32 %v882, 1.442695
    %v927 = vpow.pop %v926
    %v928 = vmul.f32 %v883, 1.442695
    %v929 = vpow.pop %v928
    %v930 = vmul.f32 %v884, 1.442695
    %v931 = vpow.pop %v930
    %v932 = vmul.f32 %v885, 1.442695
    %v933 = vpow.pop %v932
    %v934 = vmul.f32 %v886, 1.442695
    %v935 = vpow.pop %v934
    %v936 = vmul.f32 %v887, 1.442695
    %v937 = vpow.pop %v936
    %v938 = vmul.f32 %v888, 1.442695
    %v939 = vpow.pop %v938
    %v940 = vmul.f32 %v889, 1.442695
    %v941 = vpow.pop %v940
    %v942 = vmul.f32 %v890, 1.442695
    %v943 = vpow.pop %v942
    %v944 = vmul.f32 %v891, 1.442695
    %v945 = vpow.pop %v944
    %v946 = vmul.f32 %v892, 1.442695
    %v947 = vpow.pop %v946
    %v948 = vmul.f32 %v893, 1.442695
    %v949 = vpow.pop %v948
    %v950 = vmul.f32 %v894, 1.442695
    %v951 = vpow.pop %v950
    %v952 = vmul.f32 %v895, 1.442695
    %v953 = vpow.pop %v952
    %v954 = vmul.f32 %v896, 1.442695
    %v955 = vpow.pop %v954
    %v956 = vmul.f32 %v897, 1.442695
    %v957 = vpow.pop %v956
    %v958 = vmul.f32 %v898, 1.442695
    %v959 = vpow.pop %v958
    %v960 = vmul.f32 %v899, 1.442695
    %v961 = vpow.pop %v960
    %v962 = vmul.f32 %v900, 1.442695
    %v963 = vpow.pop %v962
    %v964 = vmul.f32 %v901, 1.442695
    %v965 = vpow.pop %v964
    %v966 = vadd.f32 %v903, 1.0
    %v967 = vadd.f32 %v905, 1.0
    %v968 = vadd.f32 %v907, 1.0
    %v969 = vadd.f32 %v909, 1.0
    %v970 = vadd.f32 %v911, 1.0
    %v971 = vadd.f32 %v913, 1.0
    %v972 = vadd.f32 %v915, 1.0
    %v973 = vadd.f32 %v917, 1.0
    %v974 = vadd.f32 %v919, 1.0
    %v975 = vadd.f32 %v921, 1.0
    %v976 = vadd.f32 %v923, 1.0
    %v977 = vadd.f32 %v925, 1.0
    %v978 = vadd.f32 %v927, 1.0
    %v979 = vadd.f32 %v929, 1.0
    %v980 = vadd.f32 %v931, 1.0
    %v981 = vadd.f32 %v933, 1.0
    %v982 = vadd.f32 %v935, 1.0
    %v983 = vadd.f32 %v937, 1.0
    %v984 = vadd.f32 %v939, 1.0
    %v985 = vadd.f32 %v941, 1.0
    %v986 = vadd.f32 %v943, 1.0
    %v987 = vadd.f32 %v945, 1.0
    %v988 = vadd.f32 %v947, 1.0
    %v989 = vadd.f32 %v949, 1.0
    %v990 = vadd.f32 %v951, 1.0
    %v991 = vadd.f32 %v953, 1.0
    %v992 = vadd.f32 %v955, 1.0
    %v993 = vadd.f32 %v957, 1.0
    %v994 = vadd.f32 %v959, 1.0
    %v995 = vadd.f32 %v961, 1.0
    %v996 = vadd.f32 %v963, 1.0
    %v997 = vadd.f32 %v965, 1.0
    %v998 = vrcp.pop %v966
    %v999 = vmul.f32 1.0, %v998
    %v1000 = vrcp.pop %v967
    %v1001 = vmul.f32 1.0, %v1000
    %v1002 = vrcp.pop %v968
    %v1003 = vmul.f32 1.0, %v1002
    %v1004 = vrcp.pop %v969
    %v1005 = vmul.f32 1.0, %v1004
    %v1006 = vrcp.pop %v970
    %v1007 = vmul.f32 1.0, %v1006
    %v1008 = vrcp.pop %v971
    %v1009 = vmul.f32 1.0, %v1008
    %v1010 = vrcp.pop %v972
    %v1011 = vmul.f32 1.0, %v1010
    %v1012 = vrcp.pop %v973
    %v1013 = vmul.f32 1.0, %v1012
    %v1014 = vrcp.pop %v974
    %v1015 = vmul.f32 1.0, %v1014
    %v1016 = vrcp.pop %v975
    %v1017 = vmul.f32 1.0, %v1016
    %v1018 = vrcp.pop %v976
    %v1019 = vmul.f32 1.0, %v1018
    %v1020 = vrcp.pop %v977
    %v1021 = vmul.f32 1.0, %v1020
    %v1022 = vrcp.pop %v978
    %v1023 = vmul.f32 1.0, %v1022
    %v1024 = vrcp.pop %v979
    %v1025 = vmul.f32 1.0, %v1024
    %v1026 = vrcp.pop %v980
    %v1027 = vmul.f32 1.0, %v1026
    %v1028 = vrcp.pop %v981
    %v1029 = vmul.f32 1.0, %v1028
    %v1030 = vrcp.pop %v982
    %v1031 = vmul.f32 1.0, %v1030
    %v1032 = vrcp.pop %v983
    %v1033 = vmul.f32 1.0, %v1032
    %v1034 = vrcp.pop %v984
    %v1035 = vmul.f32 1.0, %v1034
    %v1036 = vrcp.pop %v985
    %v1037 = vmul.f32 1.0, %v1036
    %v1038 = vrcp.pop %v986
    %v1039 = vmul.f32 1.0, %v1038
    %v1040 = vrcp.pop %v987
    %v1041 = vmul.f32 1.0, %v1040
    %v1042 = vrcp.pop %v988
    %v1043 = vmul.f32 1.0, %v1042
    %v1044 = vrcp.pop %v989
    %v1045 = vmul.f32 1.0, %v1044
    %v1046 = vrcp.pop %v990
    %v1047 = vmul.f32 1.0, %v1046
    %v1048 = vrcp.pop %v991
    %v1049 = vmul.f32 1.0, %v1048
    %v1050 = vrcp.pop %v992
    %v1051 = vmul.f32 1.0, %v1050
    %v1052 = vrcp.pop %v993
    %v1053 = vmul.f32 1.0, %v1052
    %v1054 = vrcp.pop %v994
    %v1055 = vmul.f32 1.0, %v1054
    %v1056 = vrcp.pop %v995
    %v1057 = vmul.f32 1.0, %v1056
    %v1058 = vrcp.pop %v996
    %v1059 = vmul.f32 1.0, %v1058
    %v1060 = vrcp.pop %v997
    %v1061 = vmul.f32 1.0, %v1060
    %v1062 = vmul.f32 %v999, %v776
    %v1063 = vmul.f32 %v1001, %v778
    %v1064 = vmul.f32 %v1003, %v782
    %v1065 = vmul.f32 %v1005, %v784
    %v1066 = vmul.f32 %v1007, %v788
    %v1067 = vmul.f32 %v1009, %v790
    %v1068 = vmul.f32 %v1011, %v794
    %v1069 = vmul.f32 %v1013, %v796
    %v1070 = vmul.f32 %v1015, %v800
    %v1071 = vmul.f32 %v1017, %v802
    %v1072 = vmul.f32 %v1019, %v806
    %v1073 = vmul.f32 %v1021, %v808
    %v1074 = vmul.f32 %v1023, %v812
    %v1075 = vmul.f32 %v1025, %v814
    %v1076 = vmul.f32 %v1027, %v818
    %v1077 = vmul.f32 %v1029, %v820
    %v1078 = vmul.f32 %v1031, %v824
    %v1079 = vmul.f32 %v1033, %v826
    %v1080 = vmul.f32 %v1035, %v830
    %v1081 = vmul.f32 %v1037, %v832
    %v1082 = vmul.f32 %v1039, %v836
    %v1083 = vmul.f32 %v1041, %v838
    %v1084 = vmul.f32 %v1043, %v842
    %v1085 = vmul.f32 %v1045, %v844
    %v1086 = vmul.f32 %v1047, %v848
    %v1087 = vmul.f32 %v1049, %v850
    %v1088 = vmul.f32 %v1051, %v854
    %v1089 = vmul.f32 %v1053, %v856
    %v1090 = vmul.f32 %v1055, %v860
    %v1091 = vmul.f32 %v1057, %v862
    %v1092 = vmul.f32 %v1059, %v866
    %v1093 = vmul.f32 %v1061, %v868
    %v1094 = vsub.f32 1.0, %v999
    %v1095 = vsub.f32 1.0, %v1001
    %v1096 = vsub.f32 1.0, %v1003
    %v1097 = vsub.f32 1.0, %v1005
    %v1098 = vsub.f32 1.0, %v1007
    %v1099 = vsub.f32 1.0, %v1009
    %v1100 = vsub.f32 1.0, %v1011
    %v1101 = vsub.f32 1.0, %v1013
    %v1102 = vsub.f32 1.0, %v1015
    %v1103 = vsub.f32 1.0, %v1017
    %v1104 = vsub.f32 1.0, %v1019
    %v1105 = vsub.f32 1.0, %v1021
    %v1106 = vsub.f32 1.0, %v1023
    %v1107 = vsub.f32 1.0, %v1025
    %v1108 = vsub.f32 1.0, %v1027
    %v1109 = vsub.f32 1.0, %v1029
    %v1110 = vsub.f32 1.0, %v1031
    %v1111 = vsub.f32 1.0, %v1033
    %v1112 = vsub.f32 1.0, %v1035
    %v1113 = vsub.f32 1.0, %v1037
    %v1114 = vsub.f32 1.0, %v1039
    %v1115 = vsub.f32 1.0, %v1041
    %v1116 = vsub.f32 1.0, %v1043
    %v1117 = vsub.f32 1.0, %v1045
    %v1118 = vsub.f32 1.0, %v1047
    %v1119 = vsub.f32 1.0, %v1049
    %v1120 = vsub.f32 1.0, %v1051
    %v1121 = vsub.f32 1.0, %v1053
    %v1122 = vsub.f32 1.0, %v1055
    %v1123 = vsub.f32 1.0, %v1057
    %v1124 = vsub.f32 1.0, %v1059
    %v1125 = vsub.f32 1.0, %v1061
    %v1126 = vmul.f32 %v1094, %v615
    %v1127 = vmul.f32 %v1095, %v617
    %v1128 = vmul.f32 %v1096, %v621
    %v1129 = vmul.f32 %v1097, %v623
    %v1130 = vmul.f32 %v1098, %v627
    %v1131 = vmul.f32 %v1099, %v629
    %v1132 = vmul.f32 %v1100, %v633
    %v1133 = vmul.f32 %v1101, %v635
    %v1134 = vmul.f32 %v1102, %v639
    %v1135 = vmul.f32 %v1103, %v641
    %v1136 = vmul.f32 %v1104, %v645
    %v1137 = vmul.f32 %v1105, %v647
    %v1138 = vmul.f32 %v1106, %v651
    %v1139 = vmul.f32 %v1107, %v653
    %v1140 = vmul.f32 %v1108, %v657
    %v1141 = vmul.f32 %v1109, %v659
    %v1142 = vmul.f32 %v1110, %v663
    %v1143 = vmul.f32 %v1111, %v665
    %v1144 = vmul.f32 %v1112, %v669
    %v1145 = vmul.f32 %v1113, %v671
    %v1146 = vmul.f32 %v1114, %v675
    %v1147 = vmul.f32 %v1115, %v677
    %v1148 = vmul.f32 %v1116, %v681
    %v1149 = vmul.f32 %v1117, %v683
    %v1150 = vmul.f32 %v1118, %v687
    %v1151 = vmul.f32 %v1119, %v689
    %v1152 = vmul.f32 %v1120, %v693
    %v1153 = vmul.f32 %v1121, %v695
    %v1154 = vmul.f32 %v1122, %v699
    %v1155 = vmul.f32 %v1123, %v701
    %v1156 = vmul.f32 %v1124, %v705
    %v1157 = vmul.f32 %v1125, %v707
    %v1158 = vadd.f32 %v1062, %v1126
    %v1159 = vadd.f32 %v1063, %v1127
    %v1160 = vadd.f32 %v1064, %v1128
    %v1161 = vadd.f32 %v1065, %v1129
    %v1162 = vadd.f32 %v1066, %v1130
    %v1163 = vadd.f32 %v1067, %v1131
    %v1164 = vadd.f32 %v1068, %v1132
    %v1165 = vadd.f32 %v1069, %v1133
    %v1166 = vadd.f32 %v1070, %v1134
    %v1167 = vadd.f32 %v1071, %v1135
    %v1168 = vadd.f32 %v1072, %v1136
    %v1169 = vadd.f32 %v1073, %v1137
    %v1170 = vadd.f32 %v1074, %v1138
    %v1171 = vadd.f32 %v1075, %v1139
    %v1172 = vadd.f32 %v1076, %v1140
    %v1173 = vadd.f32 %v1077, %v1141
    %v1174 = vadd.f32 %v1078, %v1142
    %v1175 = vadd.f32 %v1079, %v1143
    %v1176 = vadd.f32 %v1080, %v1144
    %v1177 = vadd.f32 %v1081, %v1145
    %v1178 = vadd.f32 %v1082, %v1146
    %v1179 = vadd.f32 %v1083, %v1147
    %v1180 = vadd.f32 %v1084, %v1148
    %v1181 = vadd.f32 %v1085, %v1149
    %v1182 = vadd.f32 %v1086, %v1150
    %v1183 = vadd.f32 %v1087, %v1151
    %v1184 = vadd.f32 %v1088, %v1152
    %v1185 = vadd.f32 %v1089, %v1153
    %v1186 = vadd.f32 %v1090, %v1154
    %v1187 = vadd.f32 %v1091, %v1155
    %v1188 = vadd.f32 %v1092, %v1156
    %v1189 = vadd.f32 %v1093, %v1157
    %1190 = vst [vmem:[#allocation11] sm:$0xff] %v1158
    %1191 = vst [vmem:[#allocation11 + $0x8] sm:$0xff] %v1159
    %1192 = vst [vmem:[#allocation11 + $0x10] sm:$0xff] %v1160
    %1193 = vst [vmem:[#allocation11 + $0x18] sm:$0xff] %v1161
    %1194 = vst [vmem:[#allocation11 + $0x20] sm:$0xff] %v1162
    %1195 = vst [vmem:[#allocation11 + $0x28] sm:$0xff] %v1163
    %1196 = vst [vmem:[#allocation11 + $0x30] sm:$0xff] %v1164
    %1197 = vst [vmem:[#allocation11 + $0x38] sm:$0xff] %v1165
    %1198 = vst [vmem:[#allocation11 + $0x40] sm:$0xff] %v1166
    %1199 = vst [vmem:[#allocation11 + $0x48] sm:$0xff] %v1167
    %1200 = vst [vmem:[#allocation11 + $0x50] sm:$0xff] %v1168
    %1201 = vst [vmem:[#allocation11 + $0x58] sm:$0xff] %v1169
    %1202 = vst [vmem:[#allocation11 + $0x60] sm:$0xff] %v1170
    %1203 = vst [vmem:[#allocation11 + $0x68] sm:$0xff] %v1171
    %1204 = vst [vmem:[#allocation11 + $0x70] sm:$0xff] %v1172
    %1205 = vst [vmem:[#allocation11 + $0x78] sm:$0xff] %v1173
    %1206 = vst [vmem:[#allocation11 + $0x80] sm:$0xff] %v1174
    %1207 = vst [vmem:[#allocation11 + $0x88] sm:$0xff] %v1175
    %1208 = vst [vmem:[#allocation11 + $0x90] sm:$0xff] %v1176
    %1209 = vst [vmem:[#allocation11 + $0x98] sm:$0xff] %v1177
    %1210 = vst [vmem:[#allocation11 + $0xa0] sm:$0xff] %v1178
    %1211 = vst [vmem:[#allocation11 + $0xa8] sm:$0xff] %v1179
    %1212 = vst [vmem:[#allocation11 + $0xb0] sm:$0xff] %v1180
    %1213 = vst [vmem:[#allocation11 + $0xb8] sm:$0xff] %v1181
    %1214 = vst [vmem:[#allocation11 + $0xc0] sm:$0xff] %v1182
    %1215 = vst [vmem:[#allocation11 + $0xc8] sm:$0xff] %v1183
    %1216 = vst [vmem:[#allocation11 + $0xd0] sm:$0xff] %v1184
    %1217 = vst [vmem:[#allocation11 + $0xd8] sm:$0xff] %v1185
    %1218 = vst [vmem:[#allocation11 + $0xe0] sm:$0xff] %v1186
    %1219 = vst [vmem:[#allocation11 + $0xe8] sm:$0xff] %v1187
    %1220 = vst [vmem:[#allocation11 + $0xf0] sm:$0xff] %v1188
    %1221 = vst [vmem:[#allocation11 + $0xf8] sm:$0xff] %v1189
    // Predicated region
    $region46: #{tpu_custom_call.1} parent=1 // pred_check
      _
    $region47: #{tpu_custom_call.1} parent=1 // pred_check_branch
      %1223 = sbr.rel (0) target = $region49
    $region48: #{tpu_custom_call.1} parent=1 // pred_region
      %s1225 = ssub.s32 4096, 4096
      %1226 = vsyncadd [#allocation4], %s1225
      %s1227 = sshll.u32 [#allocation11], 4
      %s1228 = int_to_ptr.vmem [resolvable:$true] %s1227
      %1233 = dma.vmem_to_hbm [thread:$0]  %s1228, 4096, %s6, [#allocation4], 256, 256, 16
    $region49: #{tpu_custom_call.1} parent=1 // pred_fallthru
      _
    // Predicated region
    $region50: #{tpu_custom_call.1} parent=1 // pred_check
      _
    $region51: #{tpu_custom_call.1} parent=1 // pred_check_branch
      %1235 = sbr.rel (0) target = $region53
    $region52: #{tpu_custom_call.1} parent=1 // pred_region
      %1236 = dma.done [#allocation4], 4096
    $region53: #{tpu_custom_call.1} parent=1 // pred_fallthru
      _
    %1237 = vsyncpa [#allocation3], 1
    %1238 = vsyncpa [#allocation6], 1
    %1239 = vsyncpa [#allocation9], 1
    %1240 = vsyncpa [#allocation4], 1

</llo_original>
